<compile_context>
chip_gen: v7x
topology: tpu7x:2x2x1
jax: 0.10.0
libtpu: 0.0.40
codegen_flags: <defaults>
</compile_context>

<pallas_src>
import functools
import math

import jax
import jax.numpy as jnp
from jax.experimental import pallas as pl
from jax.experimental.pallas import tpu as pltpu

_INV_SQRT2 = 0.7071067811865476  # 1 / sqrt(2), constant multiply instead of divide


def _round_up(x, m):
    return (x + m - 1) // m * m


# ---------------------------------------------------------------------------
# Prologue kernel: w_masked = where(mask_scores > logit(threshold), weight, 0)
# ---------------------------------------------------------------------------
def _mask_weight_kernel(w_ref, s_ref, o_ref, *, logit_thr):
    mask = s_ref[...] > logit_thr                     # VPU compare, no sigmoid
    o_ref[...] = jnp.where(mask, w_ref[...], 0.0).astype(o_ref.dtype)


def _mask_weights(weight, mask_scores, logit_thr, out_dtype, tn):
    I, H = weight.shape
    return pl.pallas_call(
        functools.partial(_mask_weight_kernel, logit_thr=logit_thr),
        out_shape=jax.ShapeDtypeStruct((I, H), out_dtype),
        grid_spec=pltpu.PrefetchScalarGridSpec(
            num_scalar_prefetch=0,
            grid=(I // tn,),
            in_specs=[
                pl.BlockSpec((tn, H), lambda j: (j, 0)),   # weight tile
                pl.BlockSpec((tn, H), lambda j: (j, 0)),   # mask-score tile
            ],
            out_specs=pl.BlockSpec((tn, H), lambda j: (j, 0)),
        ),
        compiler_params=pltpu.CompilerParams(dimension_semantics=("parallel",)),
    )(weight, mask_scores)


# ---------------------------------------------------------------------------
# Main kernel: y = x @ w_masked^T + b ; out = gelu(y)
# ---------------------------------------------------------------------------
def _matmul_gelu_kernel(x_ref, w_ref, b_ref, o_ref):
    # [TM, H] contracted with [TN, H] on the shared H axis -> [TM, TN], f32 accumulate.
    y = jax.lax.dot_general(
        x_ref[...], w_ref[...],
        dimension_numbers=(((1,), (1,)), ((), ())),
        preferred_element_type=jnp.float32,
    )
    y = y + b_ref[...].astype(jnp.float32)            # (1, TN) broadcasts over TM rows
    # Exact erf-based GELU (HF "gelu"); erf runs on the EUP slot.
    o_ref[...] = (0.5 * y * (1.0 + jax.lax.erf(y * _INV_SQRT2))).astype(o_ref.dtype)


def bert_intermediate(hidden_states, threshold, weight, mask_scores, bias,
                      *, tm=512, tn=256, compute_dtype=None):
    """hidden_states [B, S, H]; weight/mask_scores [I, H]; bias [I] -> [B, S, I].

    `threshold` must be a Python float in (0, 1) (it is a schedule value in the
    movement-pruning training loop, not a learned tensor); it is folded into a
    logit-space constant on the host.
    """
    B, S, H = hidden_states.shape
    I = weight.shape[0]
    assert weight.shape == (I, H) and mask_scores.shape == (I, H) and bias.shape == (I,)

    thr = float(threshold)
    assert 0.0 < thr < 1.0
    # sigmoid(s) > t  <=>  s > log(t / (1 - t))  (boundary-equal scores are measure-zero)
    logit_thr = math.log(thr / (1.0 - thr))

    out_dtype = hidden_states.dtype
    if compute_dtype is None:
        compute_dtype = out_dtype

    # ---- tile sizes --------------------------------------------------------
    M = B * S
    tn = min(tn, I)
    assert I % tn == 0, f"intermediate size {I} must be divisible by tn={tn}"
    tm = min(tm, _round_up(M, 8))
    M_pad = _round_up(M, tm)

    # ---- prologue: mask (+ cast) the weights once --------------------------
    w_masked = _mask_weights(weight, mask_scores, logit_thr, compute_dtype, tn)

    # ---- main tiled matmul + GELU ------------------------------------------
    x = hidden_states.reshape(M, H).astype(compute_dtype)
    if M_pad != M:
        x = jnp.pad(x, ((0, M_pad - M), (0, 0)))
    b2 = bias.reshape(1, I)

    out = pl.pallas_call(
        _matmul_gelu_kernel,
        out_shape=jax.ShapeDtypeStruct((M_pad, I), out_dtype),
        grid_spec=pltpu.PrefetchScalarGridSpec(
            num_scalar_prefetch=0,
            grid=(M_pad // tm, I // tn),
            in_specs=[
                pl.BlockSpec((tm, H), lambda i, j: (i, 0)),   # activation tile
                pl.BlockSpec((tn, H), lambda i, j: (j, 0)),   # masked-weight tile
                pl.BlockSpec((1, tn), lambda i, j: (0, j)),   # bias tile
            ],
            out_specs=pl.BlockSpec((tm, tn), lambda i, j: (i, j)),
        ),
        compiler_params=pltpu.CompilerParams(
            dimension_semantics=("parallel", "parallel")),
    )(x, w_masked, b2)

    if M_pad != M:
        out = out[:M]
    return out.reshape(B, S, I)


# ---------------------------------------------------------------------------
# Pure-JAX reference (matches the PyTorch module semantics)
# ---------------------------------------------------------------------------
def _reference(hidden_states, threshold, weight, mask_scores, bias):
    mask = (jax.nn.sigmoid(mask_scores) > threshold).astype(weight.dtype)
    w = mask * weight
    y = jnp.einsum("bsh,ih->bsi", hidden_states, w) + bias
    return 0.5 * y * (1.0 + jax.lax.erf(y * _INV_SQRT2))


if __name__ == "__main__":
    # Small BERT-ish config: hidden_size=32, intermediate_size=128, batch=2, seq=8.
    B, S, H, I = 2, 8, 32, 128
    threshold = 0.55

    key = jax.random.PRNGKey(0)
    k_x, k_w, k_s, k_b = jax.random.split(key, 4)

    bound = 1.0 / math.sqrt(H)
    hidden_states = jax.random.normal(k_x, (B, S, H), dtype=jnp.float32)
    weight = jax.random.uniform(k_w, (I, H), jnp.float32, -bound, bound)
    bias = jax.random.uniform(k_b, (I,), jnp.float32, -bound, bound)
    mask_scores = jax.random.normal(k_s, (I, H), dtype=jnp.float32)

    ref = _reference(hidden_states, threshold, weight, mask_scores, bias)

    # f32 compute path: tight tolerance against the reference.
    out = bert_intermediate(hidden_states, threshold, weight, mask_scores, bias)
    out = jax.block_until_ready(out)
    assert out.shape == (B, S, I)
    assert jnp.allclose(out, ref, atol=1e-5, rtol=1e-5)

    # bf16 compute path (halves HBM traffic, 2x+ MXU rate on v6e/v7x): loose tolerance.
    out_bf16 = bert_intermediate(hidden_states, threshold, weight, mask_scores, bias,
                                 compute_dtype=jnp.bfloat16)
    out_bf16 = jax.block_until_ready(out_bf16)
    assert jnp.allclose(out_bf16, ref, atol=5e-2, rtol=5e-2)

    # Ragged M (B*S not a multiple of 8) exercises the M-padding path.
    hs2 = jax.random.normal(k_x, (1, 5, H), dtype=jnp.float32)
    out2 = jax.block_until_ready(
        bert_intermediate(hs2, threshold, weight, mask_scores, bias))
    ref2 = _reference(hs2, threshold, weight, mask_scores, bias)
    assert jnp.allclose(out2, ref2, atol=1e-5, rtol=1e-5)

    print("KERNEL_OK")
</pallas_src>

<mosaic_0001>
module attributes {stable_mosaic.version = 11 : i64} {
  func.func @_mask_weight_kernel(%arg0: i32, %arg1: memref<128x32xf32, #tpu.memory_space<vmem>>, %arg2: memref<128x32xf32, #tpu.memory_space<vmem>>, %arg3: memref<128x32xf32, #tpu.memory_space<vmem>>) attributes {dimension_semantics = [#tpu.dimension_semantics<parallel>], iteration_bounds = array<i64: 1>, scalar_prefetch = 0 : i64, scratch_operands = 0 : i64, tpu.core_type = #tpu.core_type<tc>, window_params = [{transform_indices = @transform_0, window_bounds = array<i64: 128, 32>}, {transform_indices = @transform_1, window_bounds = array<i64: 128, 32>}, {transform_indices = @transform_2, window_bounds = array<i64: 128, 32>}]} {
    %c0 = arith.constant 0 : index
    %c0_0 = arith.constant 0 : index
    %0 = vector.load %arg2[%c0, %c0_0] : memref<128x32xf32, #tpu.memory_space<vmem>>, vector<128x32xf32>
    %cst = arith.constant 0.200670689 : f32
    %1 = vector.broadcast %cst : f32 to vector<128x32xf32>
    %2 = arith.cmpf ogt, %0, %1 : vector<128x32xf32>
    %c0_1 = arith.constant 0 : index
    %c0_2 = arith.constant 0 : index
    %3 = vector.load %arg1[%c0_1, %c0_2] : memref<128x32xf32, #tpu.memory_space<vmem>>, vector<128x32xf32>
    %cst_3 = arith.constant 0.000000e+00 : f32
    %4 = vector.broadcast %cst_3 : f32 to vector<128x32xf32>
    %5 = arith.select %2, %3, %4 : vector<128x32xi1>, vector<128x32xf32>
    %c0_4 = arith.constant 0 : index
    %c0_5 = arith.constant 0 : index
    %6 = vector.load %arg3[%c0_4, %c0_5] : memref<128x32xf32, #tpu.memory_space<vmem>>, vector<128x32xf32>
    tpu.vector_store %arg3[%c0_4, %c0_5], %5 {strides = array<i32>} : memref<128x32xf32, #tpu.memory_space<vmem>>, vector<128x32xf32>,
    return
  }
  func.func @transform_0(%arg0: i32) -> (i32, i32) {
    %c0_i32 = arith.constant 0 : i32
    %c0_i32_0 = arith.constant 0 : i32
    return %arg0, %c0_i32 : i32, i32
  }
  func.func @transform_1(%arg0: i32) -> (i32, i32) {
    %c0_i32 = arith.constant 0 : i32
    %c0_i32_0 = arith.constant 0 : i32
    return %arg0, %c0_i32 : i32, i32
  }
  func.func @transform_2(%arg0: i32) -> (i32, i32) {
    %c0_i32 = arith.constant 0 : i32
    %c0_i32_0 = arith.constant 0 : i32
    return %arg0, %c0_i32 : i32, i32
  }
}

</mosaic_0001>

<llo_original>
// kernel: tpu_custom_call.1
$region0: #{tpu_custom_call.1}
  #allocation0 [shape = 'u32[]', space=smem, size = 0x4, offset = 0x4, fixed_abs, tag = 'smem constant byte address 0x4 - core index']
  #allocation1 [shape = 'u32[144,128]{1,0:T(1,128)}', space=vmem, size = 0x12000, scoped, tag = 'internal scratch']
  %s0 = inlined_call_operand.vmem [shape: f32[128,32], index: 0, kind: input, shape index: {}]
  %s1 = inlined_call_operand.vmem [shape: f32[128,32], index: 1, kind: input, shape index: {}]
  %s2 = inlined_call_operand.vmem [shape: f32[128,32], index: 2, kind: output, shape index: {}]
  %s3 = sld [smem:[#allocation0]]
  $region18: #{tpu_custom_call.1} parent=0
    _
  %s5 = ssub.s32 1, %s3
  %s6 = scalar_select 0, %s5, %s3
  // Predicated region
  $region2: #{tpu_custom_call.1} parent=0 // pred_check
    _
  $region3: #{tpu_custom_call.1} parent=0 // pred_check_branch
    %8 = sbr.rel (0) target = $region5
  $region4: #{tpu_custom_call.1} parent=0 // pred_region
    _
  $region5: #{tpu_custom_call.1} parent=0 // pred_fallthru
    _
  // Predicated region
  $region6: #{tpu_custom_call.1} parent=0 // pred_check
    _
  $region7: #{tpu_custom_call.1} parent=0 // pred_check_branch
    %10 = sbr.rel (0) target = $region9
  $region8: #{tpu_custom_call.1} parent=0 // pred_region
    _
  $region9: #{tpu_custom_call.1} parent=0 // pred_fallthru
    _
  %v11 = vld [vmem:[%s1] sm:$0xff]
  %v12 = vld [vmem:[%s1 + $0x8] sm:$0xff]
  %v13 = vld [vmem:[%s1 + $0x10] sm:$0xff]
  %v14 = vld [vmem:[%s1 + $0x18] sm:$0xff]
  %v15 = vld [vmem:[%s1 + $0x20] sm:$0xff]
  %v16 = vld [vmem:[%s1 + $0x28] sm:$0xff]
  %v17 = vld [vmem:[%s1 + $0x30] sm:$0xff]
  %v18 = vld [vmem:[%s1 + $0x38] sm:$0xff]
  %v19 = vld [vmem:[%s1 + $0x40] sm:$0xff]
  %v20 = vld [vmem:[%s1 + $0x48] sm:$0xff]
  %v21 = vld [vmem:[%s1 + $0x50] sm:$0xff]
  %v22 = vld [vmem:[%s1 + $0x58] sm:$0xff]
  %v23 = vld [vmem:[%s1 + $0x60] sm:$0xff]
  %v24 = vld [vmem:[%s1 + $0x68] sm:$0xff]
  %v25 = vld [vmem:[%s1 + $0x70] sm:$0xff]
  %v26 = vld [vmem:[%s1 + $0x78] sm:$0xff]
  %vm27 = vcmp.gt.f32.partialorder %v11, 0.20067069
  %vm28 = vcmp.gt.f32.partialorder %v12, 0.20067069
  %vm29 = vcmp.gt.f32.partialorder %v13, 0.20067069
  %vm30 = vcmp.gt.f32.partialorder %v14, 0.20067069
  %vm31 = vcmp.gt.f32.partialorder %v15, 0.20067069
  %vm32 = vcmp.gt.f32.partialorder %v16, 0.20067069
  %vm33 = vcmp.gt.f32.partialorder %v17, 0.20067069
  %vm34 = vcmp.gt.f32.partialorder %v18, 0.20067069
  %vm35 = vcmp.gt.f32.partialorder %v19, 0.20067069
  %vm36 = vcmp.gt.f32.partialorder %v20, 0.20067069
  %vm37 = vcmp.gt.f32.partialorder %v21, 0.20067069
  %vm38 = vcmp.gt.f32.partialorder %v22, 0.20067069
  %vm39 = vcmp.gt.f32.partialorder %v23, 0.20067069
  %vm40 = vcmp.gt.f32.partialorder %v24, 0.20067069
  %vm41 = vcmp.gt.f32.partialorder %v25, 0.20067069
  %vm42 = vcmp.gt.f32.partialorder %v26, 0.20067069
  %v43 = vld [vmem:[%s0] sm:$0xff]
  %v44 = vld [vmem:[%s0 + $0x8] sm:$0xff]
  %v45 = vld [vmem:[%s0 + $0x10] sm:$0xff]
  %v46 = vld [vmem:[%s0 + $0x18] sm:$0xff]
  %v47 = vld [vmem:[%s0 + $0x20] sm:$0xff]
  %v48 = vld [vmem:[%s0 + $0x28] sm:$0xff]
  %v49 = vld [vmem:[%s0 + $0x30] sm:$0xff]
  %v50 = vld [vmem:[%s0 + $0x38] sm:$0xff]
  %v51 = vld [vmem:[%s0 + $0x40] sm:$0xff]
  %v52 = vld [vmem:[%s0 + $0x48] sm:$0xff]
  %v53 = vld [vmem:[%s0 + $0x50] sm:$0xff]
  %v54 = vld [vmem:[%s0 + $0x58] sm:$0xff]
  %v55 = vld [vmem:[%s0 + $0x60] sm:$0xff]
  %v56 = vld [vmem:[%s0 + $0x68] sm:$0xff]
  %v57 = vld [vmem:[%s0 + $0x70] sm:$0xff]
  %v58 = vld [vmem:[%s0 + $0x78] sm:$0xff]
  %v59 = vsel %vm27, %v43, 0.0
  %v60 = vsel %vm28, %v44, 0.0
  %v61 = vsel %vm29, %v45, 0.0
  %v62 = vsel %vm30, %v46, 0.0
  %v63 = vsel %vm31, %v47, 0.0
  %v64 = vsel %vm32, %v48, 0.0
  %v65 = vsel %vm33, %v49, 0.0
  %v66 = vsel %vm34, %v50, 0.0
  %v67 = vsel %vm35, %v51, 0.0
  %v68 = vsel %vm36, %v52, 0.0
  %v69 = vsel %vm37, %v53, 0.0
  %v70 = vsel %vm38, %v54, 0.0
  %v71 = vsel %vm39, %v55, 0.0
  %v72 = vsel %vm40, %v56, 0.0
  %v73 = vsel %vm41, %v57, 0.0
  %v74 = vsel %vm42, %v58, 0.0
  %vm75 = vcmask 261120
  %76 = vst.msk [vmem:[%s2] sm:$0xff] %vm75, %v59
  %77 = vst.msk [vmem:[%s2 + $0x8] sm:$0xff] %vm75, %v60
  %78 = vst.msk [vmem:[%s2 + $0x10] sm:$0xff] %vm75, %v61
  %79 = vst.msk [vmem:[%s2 + $0x18] sm:$0xff] %vm75, %v62
  %80 = vst.msk [vmem:[%s2 + $0x20] sm:$0xff] %vm75, %v63
  %81 = vst.msk [vmem:[%s2 + $0x28] sm:$0xff] %vm75, %v64
  %82 = vst.msk [vmem:[%s2 + $0x30] sm:$0xff] %vm75, %v65
  %83 = vst.msk [vmem:[%s2 + $0x38] sm:$0xff] %vm75, %v66
  %84 = vst.msk [vmem:[%s2 + $0x40] sm:$0xff] %vm75, %v67
  %85 = vst.msk [vmem:[%s2 + $0x48] sm:$0xff] %vm75, %v68
  %86 = vst.msk [vmem:[%s2 + $0x50] sm:$0xff] %vm75, %v69
  %87 = vst.msk [vmem:[%s2 + $0x58] sm:$0xff] %vm75, %v70
  %88 = vst.msk [vmem:[%s2 + $0x60] sm:$0xff] %vm75, %v71
  %89 = vst.msk [vmem:[%s2 + $0x68] sm:$0xff] %vm75, %v72
  %90 = vst.msk [vmem:[%s2 + $0x70] sm:$0xff] %vm75, %v73
  %91 = vst.msk [vmem:[%s2 + $0x78] sm:$0xff] %vm75, %v74
  // Predicated region
  $region10: #{tpu_custom_call.1} parent=0 // pred_check
    _
  $region11: #{tpu_custom_call.1} parent=0 // pred_check_branch
    %93 = sbr.rel (0) target = $region13
  $region12: #{tpu_custom_call.1} parent=0 // pred_region
    _
  $region13: #{tpu_custom_call.1} parent=0 // pred_fallthru
    _
  // Predicated region
  $region14: #{tpu_custom_call.1} parent=0 // pred_check
    _
  $region15: #{tpu_custom_call.1} parent=0 // pred_check_branch
    %95 = sbr.rel (0) target = $region17
  $region16: #{tpu_custom_call.1} parent=0 // pred_region
    _
  $region17: #{tpu_custom_call.1} parent=0 // pred_fallthru
    _

</llo_original>
